<compile_context>
chip_gen: v6e
topology: v6e:2x2x1
jax: 0.10.0
libtpu: 0.0.40
codegen_flags: <defaults>
</compile_context>

<pallas_src>
import functools

import jax
import jax.numpy as jnp
from jax.experimental import pallas as pl
from jax.experimental.pallas import tpu as pltpu

_LANE = 128
_TARGET_TILE_BYTES = 2 * 1024 * 1024  # per input-tile VMEM budget (safe with double buffering)


def _causal_conv1d_kernel(x_ref, w_ref, b_ref, o_ref, win_ref, *, K, TL, P):
    # x_ref  : (1, TL, DC)      current sequence tile (channel-last; channels on lanes)
    # w_ref  : (K, DC)          depthwise taps (grid-resident: constant index over seq axis)
    # b_ref  : (1, DC)          per-channel bias (grid-resident)
    # o_ref  : (1, TL, DC)      output tile
    # win_ref: (1, P + TL, DC)  persistent padded window; rows [:P] hold the causal halo
    j = pl.program_id(2)  # sequential ('arbitrary') sequence-tile axis (innermost)

    w = w_ref[...].astype(jnp.float32)                       # (K, DC)
    bias = b_ref[...].astype(jnp.float32)[:, None, :]        # (1, 1, DC)
    x_tile = x_ref[...]                                      # (1, TL, DC), native dtype

    if K == 1:
        acc = x_tile.astype(jnp.float32) * w[0]
    else:
        @pl.when(j == 0)
        def _():
            # Causal left-pad: first seq tile of each (batch, channel-tile) sees zeros.
            win_ref[:, :P, :] = jnp.zeros((1, P, win_ref.shape[2]), win_ref.dtype)

        # One aligned full-tile store into the window (P is a sublane-granule multiple).
        win_ref[:, P:, :] = x_tile

        # Load the window once, upcast to f32, and accumulate K statically-shifted slices.
        xw = win_ref[...].astype(jnp.float32)                # (1, P + TL, DC)
        base = P - (K - 1)
        acc = xw[:, base:base + TL, :] * w[0]
        for k in range(1, K):
            acc = acc + xw[:, base + k:base + k + TL, :] * w[k]

        # Carry the last P input rows for the next sequence tile (TL >= P by construction).
        win_ref[:, :P, :] = x_tile[:, TL - P:, :]

    o_ref[...] = (acc + bias).astype(o_ref.dtype)


def causal_conv1d(x, weight, bias, *, seq_tile=None, channel_tile=None):
    """x: (b, l, d); weight: (K, d) depthwise taps (PyTorch (d,1,K) transposed); bias: (d,)."""
    b, l, d = x.shape
    K, dw = weight.shape
    assert dw == d and bias.shape == (d,)

    # --- lane-dense channels: pad d up to a multiple of 128 (no-op for real Mamba widths) ---
    d_pad = -(-d // _LANE) * _LANE
    if d_pad != d:
        x = jnp.pad(x, ((0, 0), (0, 0), (0, d_pad - d)))
        weight = jnp.pad(weight, ((0, 0), (0, d_pad - d)))
        bias = jnp.pad(bias, ((0, d_pad - d),))
    bias2 = bias.reshape(1, d_pad)

    # --- channel tile: extra parallel grid axis for very wide models ---
    if channel_tile is None:
        channel_tile = 512 if d_pad % 512 == 0 else (256 if d_pad % 256 == 0 else _LANE)
    DC = min(channel_tile, d_pad)
    assert d_pad % DC == 0 and DC % _LANE == 0

    # --- sequence tile / halo sizing: sublane-granule aligned, sized for double-buffered VMEM ---
    itemsize = jnp.dtype(x.dtype).itemsize
    granule = 8 if itemsize >= 4 else (32 // itemsize)        # 8 rows f32, 16 bf16, 32 int8
    P = max(granule, -(-(max(K - 1, 1)) // granule) * granule)  # halo rows, granule multiple

    if seq_tile is None:
        seq_tile = max(granule, (_TARGET_TILE_BYTES // (DC * itemsize)) // granule * granule)
    else:
        seq_tile = max(granule, -(-seq_tile // granule) * granule)
    TL = min(seq_tile, -(-l // granule) * granule)            # don't exceed (rounded) seq length
    TL = max(TL, P)                                           # halo carry comes from one tile

    nL = pl.cdiv(l, TL)
    nC = d_pad // DC

    # --- VMEM budget: 2x in + 2x out tiles, window scratch, f32 window + accumulator temps ---
    tile_bytes = TL * DC * itemsize
    win_bytes = (P + TL) * DC * itemsize if K > 1 else granule * DC * itemsize
    need = 4 * tile_bytes + win_bytes + 2 * (P + TL) * DC * 4 + (4 << 20)
    vmem_limit = int(min(48 << 20, max(32 << 20, need)))

    win_rows = (P + TL) if K > 1 else granule
    kernel = functools.partial(_causal_conv1d_kernel, K=K, TL=TL, P=P)

    y = pl.pallas_call(
        kernel,
        out_shape=jax.ShapeDtypeStruct((b, l, d_pad), x.dtype),
        grid=(b, nC, nL),
        in_specs=[
            pl.BlockSpec((1, TL, DC), lambda i, c, j: (i, j, c)),   # x tile
            pl.BlockSpec((K, DC), lambda i, c, j: (0, c)),          # weights (resident per c)
            pl.BlockSpec((1, DC), lambda i, c, j: (0, c)),          # bias (resident per c)
        ],
        out_specs=pl.BlockSpec((1, TL, DC), lambda i, c, j: (i, j, c)),
        scratch_shapes=[pltpu.VMEM((1, win_rows, DC), x.dtype)],    # halo window carry
        compiler_params=pltpu.CompilerParams(
            dimension_semantics=("parallel", "parallel", "arbitrary"),
            vmem_limit_bytes=vmem_limit,
        ),
    )(x, weight, bias2)

    if d_pad != d:
        y = y[:, :, :d]
    return y


def _reference(x, weight, bias):
    # Pure-JAX reference with identical semantics (for correctness check).
    b, l, d = x.shape
    K = weight.shape[0]
    x_pad = jnp.pad(x, ((0, 0), (K - 1, 0), (0, 0)))
    out = jnp.broadcast_to(bias.reshape(1, 1, d), (b, l, d)).astype(jnp.float32)
    for k in range(K):
        out = out + x_pad[:, k:k + l, :].astype(jnp.float32) * weight[k, :].astype(jnp.float32)
    return out.astype(x.dtype)


if __name__ == "__main__":
    # Module config: CausalConv1d(channels=d, kernel_size=K)
    batch, seqlen, channels, ksize = 2, 16, 4, 4

    key = jax.random.PRNGKey(0)
    kx, kw, kb = jax.random.split(key, 3)

    x = jax.random.normal(kx, (batch, seqlen, channels), dtype=jnp.float32)
    # nn.Conv1d(depthwise) weight has shape (channels, 1, K); we store it as (K, channels).
    bound = 1.0 / (ksize ** 0.5)
    weight = jax.random.uniform(kw, (ksize, channels), minval=-bound, maxval=bound, dtype=jnp.float32)
    bias = jax.random.uniform(kb, (channels,), minval=-bound, maxval=bound, dtype=jnp.float32)

    y_ref = _reference(x, weight, bias)

    # Default tiling (single seq tile at this toy length).
    y = jax.block_until_ready(causal_conv1d(x, weight, bias))
    assert y.shape == (batch, seqlen, channels)
    assert jnp.allclose(y, y_ref, atol=1e-5, rtol=1e-5)

    # Multiple sequence tiles: exercises the VMEM halo carry across the 'arbitrary' axis.
    y_tiled = jax.block_until_ready(causal_conv1d(x, weight, bias, seq_tile=8))
    assert jnp.allclose(y_tiled, y_ref, atol=1e-5, rtol=1e-5)

    # Partial last sequence tile (l not a multiple of the tile).
    x_odd = jax.random.normal(kx, (batch, 13, channels), dtype=jnp.float32)
    y_odd = jax.block_until_ready(causal_conv1d(x_odd, weight, bias, seq_tile=8))
    assert jnp.allclose(y_odd, _reference(x_odd, weight, bias), atol=1e-5, rtol=1e-5)

    # bf16 path: activations stay bf16 through HBM/VMEM, f32 accumulation in-register.
    xb = x.astype(jnp.bfloat16)
    wb = weight.astype(jnp.bfloat16)
    bb = bias.astype(jnp.bfloat16)
    yb = jax.block_until_ready(causal_conv1d(xb, wb, bb, seq_tile=16))
    yb_ref = _reference(xb, wb, bb)
    assert jnp.allclose(yb.astype(jnp.float32), yb_ref.astype(jnp.float32), atol=3e-2, rtol=3e-2)

    print("KERNEL_OK")
</pallas_src>

<mosaic_0001>
module attributes {stable_mosaic.version = 11 : i64} {
  func.func @_causal_conv1d_kernel(%arg0: i32, %arg1: i32, %arg2: i32, %arg3: memref<1x16x128xf32, #tpu.memory_space<vmem>>, %arg4: memref<4x128xf32, #tpu.memory_space<vmem>>, %arg5: memref<1x128xf32, #tpu.memory_space<vmem>>, %arg6: memref<1x16x128xf32, #tpu.memory_space<vmem>>, %arg7: memref<1x24x128xf32, #tpu.memory_space<vmem>>) attributes {dimension_semantics = [#tpu.dimension_semantics<parallel>, #tpu.dimension_semantics<parallel>, #tpu.dimension_semantics<arbitrary>], iteration_bounds = array<i64: 2, 1, 1>, scalar_prefetch = 0 : i64, scratch_operands = 1 : i64, tpu.core_type = #tpu.core_type<tc>, window_params = [{transform_indices = @transform_0, window_bounds = array<i64: 1, 16, 128>}, {transform_indices = @transform_1, window_bounds = array<i64: 4, 128>}, {transform_indices = @transform_2, window_bounds = array<i64: 1, 128>}, {transform_indices = @transform_3, window_bounds = array<i64: 1, 16, 128>}]} {
    %c0 = arith.constant 0 : index
    %c0_0 = arith.constant 0 : index
    %0 = vector.load %arg4[%c0, %c0_0] : memref<4x128xf32, #tpu.memory_space<vmem>>, vector<4x128xf32>
    %c0_1 = arith.constant 0 : index
    %c0_2 = arith.constant 0 : index
    %1 = vector.load %arg5[%c0_1, %c0_2] : memref<1x128xf32, #tpu.memory_space<vmem>>, vector<1x128xf32>
    %2 = vector.shape_cast %1 : vector<1x128xf32> to vector<1x1x128xf32>
    %c0_3 = arith.constant 0 : index
    %c0_4 = arith.constant 0 : index
    %c0_5 = arith.constant 0 : index
    %3 = vector.load %arg3[%c0_3, %c0_4, %c0_5] : memref<1x16x128xf32, #tpu.memory_space<vmem>>, vector<1x16x128xf32>
    %c0_i32 = arith.constant 0 : i32
    %4 = arith.cmpi eq, %arg2, %c0_i32 : i32
    %5 = arith.extui %4 : i1 to i32
    %c0_i32_6 = arith.constant 0 : i32
    %6 = arith.cmpi ne, %5, %c0_i32_6 : i32
    scf.if %6 {
      %cst = arith.constant 0.000000e+00 : f32
      %41 = vector.broadcast %cst : f32 to vector<1x8x128xf32>
      %c0_18 = arith.constant 0 : index
      %c0_19 = arith.constant 0 : index
      %c0_20 = arith.constant 0 : index
      %42 = vector.load %arg7[%c0_18, %c0_19, %c0_20] : memref<1x24x128xf32, #tpu.memory_space<vmem>>, vector<1x8x128xf32>
      tpu.vector_store %arg7[%c0_18, %c0_19, %c0_20], %41 {strides = array<i32>} : memref<1x24x128xf32, #tpu.memory_space<vmem>>, vector<1x8x128xf32>,
    } else {
    }
    %c0_7 = arith.constant 0 : index
    %c8 = arith.constant 8 : index
    %c0_8 = arith.constant 0 : index
    %7 = vector.load %arg7[%c0_7, %c8, %c0_8] : memref<1x24x128xf32, #tpu.memory_space<vmem>>, vector<1x16x128xf32>
    tpu.vector_store %arg7[%c0_7, %c8, %c0_8], %3 {strides = array<i32>} : memref<1x24x128xf32, #tpu.memory_space<vmem>>, vector<1x16x128xf32>,
    %c0_9 = arith.constant 0 : index
    %c0_10 = arith.constant 0 : index
    %c0_11 = arith.constant 0 : index
    %8 = vector.load %arg7[%c0_9, %c0_10, %c0_11] : memref<1x24x128xf32, #tpu.memory_space<vmem>>, vector<1x24x128xf32>
    %9 = vector.extract_strided_slice %8 {offsets = [0, 5, 0], sizes = [1, 16, 128], strides = [1, 1, 1]} : vector<1x24x128xf32> to vector<1x16x128xf32>
    %10 = vector.extract_strided_slice %0 {offsets = [0, 0], sizes = [1, 128], strides = [1, 1]} : vector<4x128xf32> to vector<1x128xf32>
    %11 = vector.shape_cast %10 : vector<1x128xf32> to vector<128xf32>
    %12 = vector.shape_cast %11 : vector<128xf32> to vector<1x1x128xf32>
    %13 = vector.broadcast %12 : vector<1x1x128xf32> to vector<1x16x128xf32>
    %14 = arith.mulf %9, %13 : vector<1x16x128xf32>
    %15 = vector.extract_strided_slice %8 {offsets = [0, 6, 0], sizes = [1, 16, 128], strides = [1, 1, 1]} : vector<1x24x128xf32> to vector<1x16x128xf32>
    %16 = vector.extract_strided_slice %0 {offsets = [1, 0], sizes = [1, 128], strides = [1, 1]} : vector<4x128xf32> to vector<1x128xf32>
    %17 = vector.shape_cast %16 : vector<1x128xf32> to vector<128xf32>
    %18 = vector.shape_cast %17 : vector<128xf32> to vector<1x1x128xf32>
    %19 = vector.broadcast %18 : vector<1x1x128xf32> to vector<1x16x128xf32>
    %20 = arith.mulf %15, %19 : vector<1x16x128xf32>
    %21 = arith.addf %14, %20 : vector<1x16x128xf32>
    %22 = vector.extract_strided_slice %8 {offsets = [0, 7, 0], sizes = [1, 16, 128], strides = [1, 1, 1]} : vector<1x24x128xf32> to vector<1x16x128xf32>
    %23 = vector.extract_strided_slice %0 {offsets = [2, 0], sizes = [1, 128], strides = [1, 1]} : vector<4x128xf32> to vector<1x128xf32>
    %24 = vector.shape_cast %23 : vector<1x128xf32> to vector<128xf32>
    %25 = vector.shape_cast %24 : vector<128xf32> to vector<1x1x128xf32>
    %26 = vector.broadcast %25 : vector<1x1x128xf32> to vector<1x16x128xf32>
    %27 = arith.mulf %22, %26 : vector<1x16x128xf32>
    %28 = arith.addf %21, %27 : vector<1x16x128xf32>
    %29 = vector.extract_strided_slice %8 {offsets = [0, 8, 0], sizes = [1, 16, 128], strides = [1, 1, 1]} : vector<1x24x128xf32> to vector<1x16x128xf32>
    %30 = vector.extract_strided_slice %0 {offsets = [3, 0], sizes = [1, 128], strides = [1, 1]} : vector<4x128xf32> to vector<1x128xf32>
    %31 = vector.shape_cast %30 : vector<1x128xf32> to vector<128xf32>
    %32 = vector.shape_cast %31 : vector<128xf32> to vector<1x1x128xf32>
    %33 = vector.broadcast %32 : vector<1x1x128xf32> to vector<1x16x128xf32>
    %34 = arith.mulf %29, %33 : vector<1x16x128xf32>
    %35 = arith.addf %28, %34 : vector<1x16x128xf32>
    %36 = vector.extract_strided_slice %3 {offsets = [0, 8, 0], sizes = [1, 8, 128], strides = [1, 1, 1]} : vector<1x16x128xf32> to vector<1x8x128xf32>
    %c0_12 = arith.constant 0 : index
    %c0_13 = arith.constant 0 : index
    %c0_14 = arith.constant 0 : index
    %37 = vector.load %arg7[%c0_12, %c0_13, %c0_14] : memref<1x24x128xf32, #tpu.memory_space<vmem>>, vector<1x8x128xf32>
    tpu.vector_store %arg7[%c0_12, %c0_13, %c0_14], %36 {strides = array<i32>} : memref<1x24x128xf32, #tpu.memory_space<vmem>>, vector<1x8x128xf32>,
    %38 = vector.broadcast %2 : vector<1x1x128xf32> to vector<1x16x128xf32>
    %39 = arith.addf %35, %38 : vector<1x16x128xf32>
    %c0_15 = arith.constant 0 : index
    %c0_16 = arith.constant 0 : index
    %c0_17 = arith.constant 0 : index
    %40 = vector.load %arg6[%c0_15, %c0_16, %c0_17] : memref<1x16x128xf32, #tpu.memory_space<vmem>>, vector<1x16x128xf32>
    tpu.vector_store %arg6[%c0_15, %c0_16, %c0_17], %39 {strides = array<i32>} : memref<1x16x128xf32, #tpu.memory_space<vmem>>, vector<1x16x128xf32>,
    return
  }
  func.func @transform_0(%arg0: i32, %arg1: i32, %arg2: i32) -> (i32, i32, i32) {
    %c0_i32 = arith.constant 0 : i32
    return %arg0, %arg2, %arg1 : i32, i32, i32
  }
  func.func @transform_1(%arg0: i32, %arg1: i32, %arg2: i32) -> (i32, i32) {
    %c0_i32 = arith.constant 0 : i32
    %c0_i32_0 = arith.constant 0 : i32
    return %c0_i32, %arg1 : i32, i32
  }
  func.func @transform_2(%arg0: i32, %arg1: i32, %arg2: i32) -> (i32, i32) {
    %c0_i32 = arith.constant 0 : i32
    %c0_i32_0 = arith.constant 0 : i32
    return %c0_i32, %arg1 : i32, i32
  }
  func.func @transform_3(%arg0: i32, %arg1: i32, %arg2: i32) -> (i32, i32, i32) {
    %c0_i32 = arith.constant 0 : i32
    return %arg0, %arg2, %arg1 : i32, i32, i32
  }
}

</mosaic_0001>

<llo_original>
// kernel: tpu_custom_call.1
$region0: #{tpu_custom_call.1}
  #allocation0 [shape = 'u32[]', space=smem, size = 0x4, offset = 0x4, fixed_abs, tag = 'smem constant byte address 0x4 - core index']
  #allocation1 [shape = 'u32[144,128]{1,0:T(1,128)}', space=vmem, size = 0x12000, scoped, tag = 'internal scratch']
  #allocation2 [shape = 'f32[1,24,128]{2,1,0:T(8,128)}', space=vmem, size = 0x3000, scoped, tag = 'scratch operand']
  %s0 = inlined_call_operand.hbm [shape: f32[2,16,128], index: 0, kind: input, shape index: {}]
  %s1 = inlined_call_operand.hbm [shape: f32[4,128], index: 1, kind: input, shape index: {}]
  %s2 = inlined_call_operand.vmem [shape: f32[1,128], index: 2, kind: input, shape index: {}]
  %s3 = inlined_call_operand.hbm [shape: f32[2,16,128], index: 3, kind: output, shape index: {}]
  %s4 = sld [smem:[#allocation0]]
  $region57: #{tpu_custom_call.1} parent=0
    _
  %s6 = ssub.s32 1, %s4
  %s7 = scalar_select 0, %s6, %s4
  $region1: #{tpu_custom_call.1} parent=0
    #allocation3 [shape = 'u8[16384]{0}', space=vmem, size = 0x4000, scoped, tag = 'input window, operand 0']
    #allocation4 [shape = 's32[2]{0}', space=sflag, size = 0x8, scoped, tag = 'scoped memory for tpu_custom_call.1']
    #allocation5 [shape = 's32[2]{0}', space=sflag, size = 0x8, scoped, tag = 'scoped memory for tpu_custom_call.1']
    #allocation6 [shape = 'u8[2048]{0}', space=vmem, size = 0x800, scoped, tag = 'input window, operand 1, single buffered']
    #allocation7 [shape = 's32[1]{0}', space=sflag, size = 0x4, scoped, tag = 'scoped memory for tpu_custom_call.1']
    #allocation8 [shape = 'u8[16384]{0}', space=vmem, size = 0x4000, scoped, tag = 'output window, operand 0']
    %8 = vsyncpa [#allocation4], 0
    %s9 = scalar_lea.sflag [#allocation4], 1
    %10 = vsyncpa %s9, 0
    %11 = vsyncpa [#allocation7], 0
    %12 = vsyncpa [#allocation5], 0
    %s13 = scalar_lea.sflag [#allocation5], 1
    %14 = vsyncpa %s13, 0
    loop: start=0, step=1, limit=4
    $region2: #{tpu_custom_call.1} parent=1 // loop_pre_header
      _
    $region3: #{tpu_custom_call.1} parent=1 // loop_header
      %s16 = sphi 0, %s20
      %p17 = scmp.ge.s32.totalorder %s16, 4
      %s23 = sphi 0, %s42
      %s24 = sphi 0, %s38
      %s25 = sphi 0, %s34
      %s26 = sphi 0, %s23
      %s27 = sphi 0, %s24
      %s28 = sphi 0, %s25
      %s29 = sphi 0, %s26
      %s30 = sphi 0, %s27
      %s31 = sphi 0, %s28
      %s49 = sphi 0, %s51
      %s52 = sphi 0, %s49
      %s53 = sphi 0, %s52
      %s69 = sphi 0, %s53
      %s75 = sphi 0, %s77
      %s78 = sphi 0, %s75
      %s79 = sphi 0, %s78
      %s95 = sphi 0, %s79
      %s101 = sphi 0, %s103
      %s104 = sphi 0, %s101
      %s105 = sphi 0, %s104
      %s121 = sphi 0, %s105
      %s131 = sphi 0, %s133
      %s134 = sphi 0, %s131
      %s135 = sphi 0, %s134
      %s151 = sphi 0, %s135
    $region4: #{tpu_custom_call.1} parent=1 // loop_header_branch
      %19 = sbr.rel (%p17) target = $region8
    $region5: #{tpu_custom_call.1} parent=1 // loop_body
      %s21 = ssub.s32 %s16, 1
      %s22 = ssub.s32 %s16, 2
      %s32 = sadd.s32 1, %s25
      %p33 = scmp.ge.s32.totalorder %s32, 1
      %s34 = scalar_select %p33, 0, %s32
      %s35 = sadd.s32 1, %s24
      %s36 = scalar_select %p33, %s35, %s24
      %p37 = scmp.ge.s32.totalorder %s36, 1
      %s38 = scalar_select %p37, 0, %s36
      %s39 = sadd.s32 1, %s23
      %s40 = scalar_select %p37, %s39, %s23
      %p41 = scmp.ge.s32.totalorder %s40, 2
      %s42 = scalar_select %p41, 0, %s40
      %s43 = ssub.s32 %s23, %s42
      %s44 = ssub.s32 %s25, %s34
      %s45 = sor.u32 %s43, %s44
      %s46 = ssub.s32 %s24, %s38
      %s47 = sor.u32 %s45, %s46
      %p48 = scmp.eq.s32.totalorder %s47, 0
      %s50 = sadd.s32 %s49, 1
      %s51 = scalar_select %p48, %s49, %s50
      %p54 = pneg %p48
      %p55 = scmp.eq.s32.totalorder %s16, 1
      %p56 = por %p54, %p55
      %p57 = scmp.ne.s32.totalorder %s49, %s52
      %p58 = scmp.eq.s32.totalorder %s16, 0
      %p59 = por %p57, %p58
      %p60 = scmp.ne.s32.totalorder %s49, %s52
      %p61 = scmp.eq.s32.totalorder %s21, 1
      %p62 = por %p60, %p61
      %p63 = scmp.ne.s32.totalorder %s52, %s53
      %p64 = scmp.eq.s32.totalorder %s21, 0
      %p65 = por %p63, %p64
      %p66 = scmp.ne.s32.totalorder %s52, %s53
      %p67 = scmp.eq.s32.totalorder %s22, 1
      %p68 = por %p66, %p67
      %p70 = scmp.ne.s32.totalorder %s53, %s69
      %p71 = scmp.eq.s32.totalorder %s22, 0
      %p72 = por %p70, %p71
      %s73 = ssub.s32 %s24, %s38
      %p74 = scmp.eq.s32.totalorder %s73, 0
      %s76 = sadd.s32 %s75, 1
      %s77 = scalar_select %p74, %s75, %s76
      %p80 = pneg %p74
      %p81 = scmp.eq.s32.totalorder %s16, 1
      %p82 = por %p80, %p81
      %p83 = scmp.ne.s32.totalorder %s75, %s78
      %p84 = scmp.eq.s32.totalorder %s16, 0
      %p85 = por %p83, %p84
      %p86 = scmp.ne.s32.totalorder %s75, %s78
      %p87 = scmp.eq.s32.totalorder %s21, 1
      %p88 = por %p86, %p87
      %p89 = scmp.ne.s32.totalorder %s78, %s79
      %p90 = scmp.eq.s32.totalorder %s21, 0
      %p91 = por %p89, %p90
      %p92 = scmp.ne.s32.totalorder %s78, %s79
      %p93 = scmp.eq.s32.totalorder %s22, 1
      %p94 = por %p92, %p93
      %p96 = scmp.ne.s32.totalorder %s79, %s95
      %p97 = scmp.eq.s32.totalorder %s22, 0
      %p98 = por %p96, %p97
      %s99 = ssub.s32 %s24, %s38
      %p100 = scmp.eq.s32.totalorder %s99, 0
      %s102 = sadd.s32 %s101, 1
      %s103 = scalar_select %p100, %s101, %s102
      %p106 = pneg %p100
      %p107 = scmp.eq.s32.totalorder %s16, 1
      %p108 = por %p106, %p107
      %p109 = scmp.ne.s32.totalorder %s101, %s104
      %p110 = scmp.eq.s32.totalorder %s16, 0
      %p111 = por %p109, %p110
      %p112 = scmp.ne.s32.totalorder %s101, %s104
      %p113 = scmp.eq.s32.totalorder %s21, 1
      %p114 = por %p112, %p113
      %p115 = scmp.ne.s32.totalorder %s104, %s105
      %p116 = scmp.eq.s32.totalorder %s21, 0
      %p117 = por %p115, %p116
      %p118 = scmp.ne.s32.totalorder %s104, %s105
      %p119 = scmp.eq.s32.totalorder %s22, 1
      %p120 = por %p118, %p119
      %p122 = scmp.ne.s32.totalorder %s105, %s121
      %p123 = scmp.eq.s32.totalorder %s22, 0
      %p124 = por %p122, %p123
      %s125 = ssub.s32 %s23, %s42
      %s126 = ssub.s32 %s25, %s34
      %s127 = sor.u32 %s125, %s126
      %s128 = ssub.s32 %s24, %s38
      %s129 = sor.u32 %s127, %s128
      %p130 = scmp.eq.s32.totalorder %s129, 0
      %s132 = sadd.s32 %s131, 1
      %s133 = scalar_select %p130, %s131, %s132
      %p136 = pneg %p130
      %p137 = scmp.eq.s32.totalorder %s16, 1
      %p138 = por %p136, %p137
      %p139 = scmp.ne.s32.totalorder %s131, %s134
      %p140 = scmp.eq.s32.totalorder %s16, 0
      %p141 = por %p139, %p140
      %p142 = scmp.ne.s32.totalorder %s131, %s134
      %p143 = scmp.eq.s32.totalorder %s21, 1
      %p144 = por %p142, %p143
      %p145 = scmp.ne.s32.totalorder %s134, %s135
      %p146 = scmp.eq.s32.totalorder %s21, 0
      %p147 = por %p145, %p146
      %p148 = scmp.ne.s32.totalorder %s134, %s135
      %p149 = scmp.eq.s32.totalorder %s22, 1
      %p150 = por %p148, %p149
      %p152 = scmp.ne.s32.totalorder %s135, %s151
      %p153 = scmp.eq.s32.totalorder %s22, 0
      %p154 = por %p152, %p153
      %p155 = scmp.le.s32.totalorder 1, %s16
      %p156 = scmp.lt.s32.totalorder %s16, 3
      %p157 = pnand %p155, %p156
      %p158 = pneg %p157
      // Predicated region
      $region9: #{tpu_custom_call.1} parent=5 // pred_check
        _
      $region10: #{tpu_custom_call.1} parent=5 // pred_check_branch
        %160 = sbr.rel (%p157) target = $region12
      $region11: #{tpu_custom_call.1} parent=5 // pred_region
        %s161 = ssub.s32 %s16, 1
        // Predicated region
        $region13: #{tpu_custom_call.1} parent=11 // pred_check
          %p162 = pneg %p91
        $region14: #{tpu_custom_call.1} parent=11 // pred_check_branch
          %164 = sbr.rel (%p162) target = $region16
        $region15: #{tpu_custom_call.1} parent=11 // pred_region
          %s166 = ssub.s32 64, 64
          %167 = vsyncadd [#allocation7], %s166
          %s168 = smul.addr %s27, 64
          %s169 = scalar_lea.hbm %s1, %s168
          %s171 = sshll.u32 [#allocation6], 4
          %s172 = int_to_ptr.vmem [resolvable:$true] %s171
          %174 = dma.hbm_to_vmem [thread:$0]  %s169, 64, %s172, [#allocation7]
        $region16: #{tpu_custom_call.1} parent=11 // pred_fallthru
          _
        // Predicated region
        $region17: #{tpu_custom_call.1} parent=11 // pred_check
          %p175 = pneg %p117
        $region18: #{tpu_custom_call.1} parent=11 // pred_check_branch
          %177 = sbr.rel (%p175) target = $region20
        $region19: #{tpu_custom_call.1} parent=11 // pred_region
          %p178 = scmp.lt.s32.totalorder %s27, 0
          %s179 = scalar_select %p178, %s27, 0
          %s180 = scalar_lea.vmem %s2, %s179
        $region20: #{tpu_custom_call.1} parent=11 // pred_fallthru
          _
      $region12: #{tpu_custom_call.1} parent=5 // pred_fallthru
        _
      %p181 = scmp.lt.s32.totalorder %s16, 2
      // Predicated region
      $region21: #{tpu_custom_call.1} parent=5 // pred_check
        %p182 = pneg %p181
      $region22: #{tpu_custom_call.1} parent=5 // pred_check_branch
        %184 = sbr.rel (%p182) target = $region24
      $region23: #{tpu_custom_call.1} parent=5 // pred_region
        // Predicated region
        $region25: #{tpu_custom_call.1} parent=23 // pred_check
          %p185 = pneg %p59
        $region26: #{tpu_custom_call.1} parent=23 // pred_check_branch
          %187 = sbr.rel (%p185) target = $region28
        $region27: #{tpu_custom_call.1} parent=23 // pred_region
          %s188 = sand.u32 %s49, 1
          %s189 = scalar_lea.sflag [#allocation4], %s188
          %s190 = sand.u32 %s49, 1
          %s191 = smul.addr %s190, 16
          %s192 = scalar_lea.vmem [#allocation3], %s191
          %s193 = smul.u32 2, %s25
          %s195 = ssub.s32 256, 256
          %196 = vsyncadd %s189, %s195
          %s197 = sadd.s32 %s24, %s193
          %s198 = smul.addr %s23, 2
          %s199 = sadd.s32 %s197, %s198
          %s200 = smul.addr %s199, 128
          %s201 = scalar_lea.hbm %s0, %s200
          %s202 = sshll.u32 %s192, 4
          %s203 = int_to_ptr.vmem [resolvable:$true] %s202
          %208 = dma.hbm_to_vmem [thread:$0]  %s201, 256, %s203, %s189, 128, 128, 8
        $region28: #{tpu_custom_call.1} parent=23 // pred_fallthru
          _
      $region24: #{tpu_custom_call.1} parent=5 // pred_fallthru
        _
      %p209 = scmp.le.s32.totalorder 1, %s16
      %p210 = scmp.lt.s32.totalorder %s16, 3
      %p211 = pnand %p209, %p210
      %p212 = pneg %p211
      // Predicated region
      $region29: #{tpu_custom_call.1} parent=5 // pred_check
        _
      $region30: #{tpu_custom_call.1} parent=5 // pred_check_branch
        %214 = sbr.rel (%p211) target = $region32
      $region31: #{tpu_custom_call.1} parent=5 // pred_region
        %s215 = ssub.s32 %s16, 1
        %s216 = sand.u32 %s52, 1
        %s217 = scalar_lea.sflag [#allocation4], %s216
        %s218 = sand.u32 %s52, 1
        %s219 = smul.addr %s218, 16
        %s220 = scalar_lea.vmem [#allocation3], %s219
        // Predicated region
        $region33: #{tpu_custom_call.1} parent=31 // pred_check
          %p221 = pneg %p65
        $region34: #{tpu_custom_call.1} parent=31 // pred_check_branch
          %223 = sbr.rel (%p221) target = $region36
        $region35: #{tpu_custom_call.1} parent=31 // pred_region
          %224 = dma.done %s217, 256
        $region36: #{tpu_custom_call.1} parent=31 // pred_fallthru
          _
        // Predicated region
        $region37: #{tpu_custom_call.1} parent=31 // pred_check
          %p225 = pneg %p91
        $region38: #{tpu_custom_call.1} parent=31 // pred_check_branch
          %227 = sbr.rel (%p225) target = $region40
        $region39: #{tpu_custom_call.1} parent=31 // pred_region
          %228 = dma.done [#allocation7], 64
        $region40: #{tpu_custom_call.1} parent=31 // pred_fallthru
          _
        %s229 = sand.u32 %s52, 1
        %s230 = scalar_lea.sflag [#allocation4], %s229
        %s231 = sand.u32 %s52, 1
        %s232 = smul.addr %s231, 16
        %s233 = scalar_lea.vmem [#allocation3], %s232
        %p234 = pneg %p65
        %p235 = pneg %p62
        %p236 = pneg %p91
        %p237 = pneg %p88
        %p238 = scmp.lt.s32.totalorder %s27, 0
        %s239 = scalar_select %p238, %s27, 0
        %s240 = scalar_lea.vmem %s2, %s239
        %p241 = pneg %p117
        %p242 = pneg %p114
        %p243 = pneg %p147
        %p244 = pneg %p144
        %s245 = sand.u32 %s134, 1
        %s246 = scalar_lea.sflag [#allocation5], %s245
        %s247 = sand.u32 %s134, 1
        %s248 = smul.addr %s247, 16
        %s249 = scalar_lea.vmem [#allocation8], %s248
        %s250 = smul.u32 2, %s28
        %p251 = scmp.lt.s32.totalorder %s27, 0
        %s252 = scalar_select %p251, %s27, 0
        %s253 = scalar_lea.vmem %s2, %s252
        %s254 = smul.u32 2, %s28
        %v255 = vld [vmem:[#allocation6] sm:$0xf]
        %v256 = vld [vmem:[%s253] sm:$0x1]
        %v257 = vld [vmem:[%s220] sm:$0xff]
        %v258 = vld [vmem:[%s220 + $0x8] sm:$0xff]
        %p259 = scmp.eq.s32.totalorder %s28, 0
        // Predicated region
        $region41: #{tpu_custom_call.1} parent=31 // pred_check
          %p260 = pneg %p259
        $region42: #{tpu_custom_call.1} parent=31 // pred_check_branch
          %262 = sbr.rel (%p260) target = $region44
        $region43: #{tpu_custom_call.1} parent=31 // pred_region
          %263 = vst [vmem:[#allocation2] sm:$0xff] 0.0
        $region44: #{tpu_custom_call.1} parent=31 // pred_fallthru
          _
        %264 = vst [vmem:[#allocation2 + $0x8] sm:$0xff] %v257
        %265 = vst [vmem:[#allocation2 + $0x10] sm:$0xff] %v258
        %v266 = vld [vmem:[#allocation2] sm:$0xff]
        %v267 = vld [vmem:[#allocation2 + $0x8] sm:$0xff]
        %v268 = vld [vmem:[#allocation2 + $0x10] sm:$0xff]
        %v269 = vlaneseq
        %v270 = vshrl.u32 %v269, 7
        %v271 = vsub.s32 0, %v270
        %v272 = vrot.slane %v255, %v271
        %v273 = vmul.f32 %v266, %v272
        %v274 = vmul.f32 %v267, %v272
        %v275 = vmul.f32 %v268, %v272
        %v276 = vlaneseq
        %v277 = vshrl.u32 %v276, 7
        %v278 = vsub.s32 1, %v277
        %v279 = vrot.slane %v255, %v278
        %v280 = vmul.f32 %v266, %v279
        %v281 = vmul.f32 %v267, %v279
        %v282 = vmul.f32 %v268, %v279
        %vm286 = vcmask 1046528
        %v287 = vrot.slane %v280, 1
        %v288 = vrot.slane %v281, 1
        %v289 = vsel %vm286, %v287, %v288
        %v290 = vrot.slane %v282, 1
        %v291 = vsel %vm286, %v288, %v290
        %v295 = vadd.f32 %v273, %v289
        %v296 = vadd.f32 %v274, %v291
        %v297 = vadd.f32 %v275, %v290
        %v298 = vlaneseq
        %v299 = vshrl.u32 %v298, 7
        %v300 = vsub.s32 2, %v299
        %v301 = vrot.slane %v255, %v300
        %v302 = vmul.f32 %v266, %v301
        %v303 = vmul.f32 %v267, %v301
        %v304 = vmul.f32 %v268, %v301
        %vm308 = vcmask 1045504
        %v309 = vrot.slane %v302, 2
        %v310 = vrot.slane %v303, 2
        %v311 = vsel %vm308, %v309, %v310
        %v312 = vrot.slane %v304, 2
        %v313 = vsel %vm308, %v310, %v312
        %v317 = vadd.f32 %v295, %v311
        %v318 = vadd.f32 %v296, %v313
        %v319 = vadd.f32 %v297, %v312
        %v320 = vlaneseq
        %v321 = vshrl.u32 %v320, 7
        %v322 = vsub.s32 3, %v321
        %v323 = vrot.slane %v255, %v322
        %v324 = vmul.f32 %v267, %v323
        %v325 = vmul.f32 %v268, %v323
        %vm328 = vcmask 1044480
        %v329 = vrot.slane %v324, 3
        %v330 = vrot.slane %v325, 3
        %v331 = vsel %vm328, %v329, %v330
        %v335 = vadd.f32 %v317, %v329
        %v336 = vadd.f32 %v318, %v331
        %v337 = vadd.f32 %v319, %v330
        %338 = vst [vmem:[#allocation2] sm:$0xff] %v258
        %v340 = vlaneseq
        %v341 = vshrl.u32 %v340, 7
        %v342 = vsub.s32 0, %v341
        %v343 = vrot.slane %v256, %v342
        %v345 = vadd.f32 %v335, %v343
        %v346 = vadd.f32 %v336, %v343
        %v347 = vadd.f32 %v337, %v343
        %348 = vst [vmem:[%s249 - $0x5] sm:$0xe0] %v345
        %349 = vst [vmem:[%s249 + $0x3] sm:$0xff] %v346
        %350 = vst [vmem:[%s249 + $0xb] sm:$0x1f] %v347
        %s351 = sand.u32 %s134, 1
        %s352 = scalar_lea.sflag [#allocation5], %s351
        %s353 = sand.u32 %s134, 1
        %s354 = smul.addr %s353, 16
        %s355 = scalar_lea.vmem [#allocation8], %s354
        // Predicated region
        $region45: #{tpu_custom_call.1} parent=31 // pred_check
          %p356 = pneg %p144
        $region46: #{tpu_custom_call.1} parent=31 // pred_check_branch
          %358 = sbr.rel (%p356) target = $region48
        $region47: #{tpu_custom_call.1} parent=31 // pred_region
          %s359 = smul.u32 2, %s28
          %s361 = ssub.s32 256, 256
          %362 = vsyncadd %s352, %s361
          %s363 = sadd.s32 %s27, %s359
          %s364 = smul.addr %s26, 2
          %s365 = sadd.s32 %s363, %s364
          %s366 = smul.addr %s365, 128
          %s367 = scalar_lea.hbm %s3, %s366
          %s368 = sshll.u32 %s355, 4
          %s369 = int_to_ptr.vmem [resolvable:$true] %s368
          %374 = dma.vmem_to_hbm [thread:$0]  %s369, 256, %s367, %s352, 128, 128, 8
        $region48: #{tpu_custom_call.1} parent=31 // pred_fallthru
          _
      $region32: #{tpu_custom_call.1} parent=5 // pred_fallthru
        _
      %p375 = scmp.le.s32.totalorder 2, %s16
      // Predicated region
      $region49: #{tpu_custom_call.1} parent=5 // pred_check
        %p376 = pneg %p375
      $region50: #{tpu_custom_call.1} parent=5 // pred_check_branch
        %378 = sbr.rel (%p376) target = $region52
      $region51: #{tpu_custom_call.1} parent=5 // pred_region
        %s379 = ssub.s32 %s16, 2
        // Predicated region
        $region53: #{tpu_custom_call.1} parent=51 // pred_check
          %p380 = pneg %p150
        $region54: #{tpu_custom_call.1} parent=51 // pred_check_branch
          %382 = sbr.rel (%p380) target = $region56
        $region55: #{tpu_custom_call.1} parent=51 // pred_region
          %s383 = sand.u32 %s135, 1
          %s384 = scalar_lea.sflag [#allocation5], %s383
          %s385 = sand.u32 %s135, 1
          %s386 = smul.addr %s385, 16
          %s387 = scalar_lea.vmem [#allocation8], %s386
          %388 = dma.done %s384, 256
        $region56: #{tpu_custom_call.1} parent=51 // pred_fallthru
          _
      $region52: #{tpu_custom_call.1} parent=5 // pred_fallthru
        _
    $region6: #{tpu_custom_call.1} parent=1 // loop_footer
      %s20 = sadd.s32 1, %s16
    $region7: #{tpu_custom_call.1} parent=1 // loop_footer_branch
      %15 = sbr.rel target = $region3
    $region8: #{tpu_custom_call.1} parent=1 // loop_exit
      _
    %389 = vsyncpa [#allocation4], 1
    %s390 = scalar_lea.sflag [#allocation4], 1
    %391 = vsyncpa %s390, 1
    %392 = vsyncpa [#allocation7], 1
    %393 = vsyncpa [#allocation5], 1
    %s394 = scalar_lea.sflag [#allocation5], 1
    %395 = vsyncpa %s394, 1

</llo_original>
